<compile_context>
chip_gen: v6e
topology: v6e:2x2x1
jax: 0.10.0
libtpu: 0.0.40
codegen_flags: <defaults>
</compile_context>

<pallas_src>
import functools
from math import sqrt

import numpy as np
import jax
import jax.numpy as jnp
from jax.experimental import pallas as pl
from jax.experimental.pallas import tpu as pltpu


# ---------------------------------------------------------------------------
# Static 0/1 selection matrices (host-built, passed with constant index_maps)
# ---------------------------------------------------------------------------
def _selection_constants(bt, P, D, H):
    g = P // H          # patch rows per head (torch .view semantics, needs H | P)
    dh = D // H
    rows = bt * P
    r = np.arange(rows)
    c = np.arange(D)
    # expand per-batch Q rows to per-(batch, patch) rows:  qexp = row_rep @ q
    row_rep = (r[:, None] // P == np.arange(bt)[None, :]).astype(np.float32)      # (rows, Bt)
    # collapse per-(batch, patch) rows back to per-batch rows:  out = b_sel @ (...)
    b_sel = np.ascontiguousarray(row_rep.T)                                       # (Bt, rows)
    head_of_row = (r % P) // g
    # mask_tiled[row, col] == 1 iff feature column `col` belongs to the head that owns `row`
    mask_tiled = (head_of_row[:, None] == (c[None, :] // dh)).astype(np.float32)  # (rows, D)
    # res_sel[c0, c1] == 1 iff c0 and c1 share the same residue mod d_head
    res_sel = ((c[:, None] % dh) == (c[None, :] % dh)).astype(np.float32)         # (D, D)
    # chunk_sum sums each d_head-wide lane chunk; chunk_rep broadcasts a chunk value back
    chunk_sum = ((c[:, None] // dh) == np.arange(H)[None, :]).astype(np.float32)  # (D, H)
    chunk_rep = np.ascontiguousarray(chunk_sum.T)                                 # (H, D)
    # group_row[r0, r1] == 1 iff rows r0, r1 belong to the same (batch, head) softmax group
    group_row = ((r[:, None] // g) == (r[None, :] // g)).astype(np.float32)       # (rows, rows)
    return row_rep, b_sel, mask_tiled, res_sel, chunk_sum, chunk_rep, group_row


# ---------------------------------------------------------------------------
# Fused kernel: projections + .view head split + softmax + attn @ V
# ---------------------------------------------------------------------------
def _cross_attn_kernel(text_ref, seq_ref, wq_ref, bq_ref, wkv_ref, bkv_ref,
                       rowrep_ref, bsel_ref, mask_ref, ressel_ref,
                       csum_ref, crep_ref, grp_ref,
                       out_ref, aw_ref, *, d_model, inv_scale):
    f32 = jnp.float32
    D = d_model

    # ---- fused projections (MXU); weights stay VMEM-resident across grid steps ----
    q = jnp.dot(text_ref[...], wq_ref[...], preferred_element_type=f32) + bq_ref[...]    # (Bt, D)
    kv = jnp.dot(seq_ref[...], wkv_ref[...], preferred_element_type=f32) + bkv_ref[...]  # (Bt*P, 2D)
    k = kv[:, :D]
    v = kv[:, D:]

    # ---- replicate Q into K's (batch*patch, feature) layout:
    #      qrep[row, col] = Q[batch(row), head(row)*dh + col % dh]
    qexp = jnp.dot(rowrep_ref[...], q, preferred_element_type=f32)                        # (Bt*P, D)
    qrep = jnp.dot(qexp * mask_ref[...], ressel_ref[...], preferred_element_type=f32)     # (Bt*P, D)

    # ---- scores in the torch-.view "chunk" layout:
    #      r[b*P + patch, j] = score of head patch//g, key position (patch % g)*H + j
    r = jnp.dot(k * qrep, csum_ref[...], preferred_element_type=f32) * f32(inv_scale)     # (Bt*P, H)

    # ---- softmax over each head group (g consecutive rows x H lanes) ----
    m = jnp.max(r)                              # block max; softmax is shift-invariant
    p = jnp.exp(r - m)                                                                    # (Bt*P, H)
    denom = jnp.sum(jnp.dot(grp_ref[...], p, preferred_element_type=f32),
                    axis=-1, keepdims=True)                                               # (Bt*P, 1)
    a = p / denom                                                                         # (Bt*P, H)
    aw_ref[...] = a.astype(aw_ref.dtype)

    # ---- attn @ V without ever leaving the d_model-wide lane layout ----
    awfull = jnp.dot(a, crep_ref[...], preferred_element_type=f32)                        # (Bt*P, D)
    u = jnp.dot(awfull * v, ressel_ref[...], preferred_element_type=f32)                  # (Bt*P, D)
    out = jnp.dot(bsel_ref[...], u * mask_ref[...], preferred_element_type=f32)           # (Bt, D)
    out_ref[...] = out.astype(out_ref.dtype)


# ---------------------------------------------------------------------------
# Wrapper: CrossAttention.forward
# ---------------------------------------------------------------------------
def _pick_batch_block(batch, max_block=8):
    bt = min(batch, max_block)
    while batch % bt:
        bt -= 1
    return bt


def cross_attention_forward(seq_features, text_features, params, n_heads, batch_block=None):
    """seq_features: (B, 1, P, d_model); text_features: (B, 1, d_txt).
    params: wq (d_txt, d_model), bq (d_model,), wk/wv (d_model, d_model), bk/bv (d_model,)
    with y = x @ w + b.  Returns (attn_output (B, 1, d_model), attn_weights (B, H, 1, P))."""
    B, _, P, D = seq_features.shape
    d_txt = text_features.shape[-1]
    H = n_heads
    assert D % H == 0, "d_model must be divisible by n_heads"
    assert P % H == 0, "TODO(synk): patch_num % n_heads != 0 not supported by this kernel"
    dtype = seq_features.dtype

    Bt = batch_block if batch_block is not None else _pick_batch_block(B)
    assert B % Bt == 0
    grid = (B // Bt,)
    rows = Bt * P

    wq = params["wq"]
    bq = params["bq"].reshape(1, D)
    wkv = jnp.concatenate([params["wk"], params["wv"]], axis=1)                  # (D, 2D)
    bkv = jnp.concatenate([params["bk"], params["bv"]], axis=0).reshape(1, 2 * D)

    consts = [jnp.asarray(m) for m in _selection_constants(Bt, P, D, H)]
    row_rep, b_sel, mask_tiled, res_sel, chunk_sum, chunk_rep, group_row = consts

    # Free metadata reshapes (contiguous HBM arrays) — no data movement.
    text2 = text_features.reshape(B, d_txt)
    seq2 = seq_features.reshape(B * P, D)

    kernel = functools.partial(_cross_attn_kernel, d_model=D, inv_scale=1.0 / sqrt(D))

    out2, aw2 = pl.pallas_call(
        kernel,
        grid=grid,
        in_specs=[
            pl.BlockSpec((Bt, d_txt), lambda i: (i, 0)),
            pl.BlockSpec((rows, D), lambda i: (i, 0)),
            pl.BlockSpec((d_txt, D), lambda i: (0, 0)),
            pl.BlockSpec((1, D), lambda i: (0, 0)),
            pl.BlockSpec((D, 2 * D), lambda i: (0, 0)),
            pl.BlockSpec((1, 2 * D), lambda i: (0, 0)),
            pl.BlockSpec((rows, Bt), lambda i: (0, 0)),
            pl.BlockSpec((Bt, rows), lambda i: (0, 0)),
            pl.BlockSpec((rows, D), lambda i: (0, 0)),
            pl.BlockSpec((D, D), lambda i: (0, 0)),
            pl.BlockSpec((D, H), lambda i: (0, 0)),
            pl.BlockSpec((H, D), lambda i: (0, 0)),
            pl.BlockSpec((rows, rows), lambda i: (0, 0)),
        ],
        out_specs=[
            pl.BlockSpec((Bt, D), lambda i: (i, 0)),
            pl.BlockSpec((rows, H), lambda i: (i, 0)),
        ],
        out_shape=[
            jax.ShapeDtypeStruct((B, D), dtype),
            jax.ShapeDtypeStruct((B * P, H), dtype),
        ],
        compiler_params=pltpu.CompilerParams(dimension_semantics=("parallel",)),
    )(text2, seq2, wq, bq, wkv, bkv,
      row_rep, b_sel, mask_tiled, res_sel, chunk_sum, chunk_rep, group_row)

    # Pure row-major reshapes back to the module's output shapes (verified index-exact).
    attn_output = out2.reshape(B, 1, D)
    attn_weights = aw2.reshape(B, H, 1, P)
    return attn_output, attn_weights


# ---------------------------------------------------------------------------
# Pure-JAX reference mirroring the PyTorch module (incl. the .view head split)
# ---------------------------------------------------------------------------
def _reference(seq_features, text_features, params, n_heads):
    B, _, P, D = seq_features.shape
    H = n_heads
    dh = D // H
    hp = jax.lax.Precision.HIGHEST

    Q = jnp.einsum('bit,td->bid', text_features, params["wq"], precision=hp) + params["bq"]
    K = jnp.einsum('bopd,de->bope', seq_features, params["wk"], precision=hp) + params["bk"]
    V = jnp.einsum('bopd,de->bope', seq_features, params["wv"], precision=hp) + params["bv"]

    Q4 = Q.reshape(B, H, 1, dh)
    K4 = K.reshape(B, H, P, dh)
    V4 = V.reshape(B, H, P, dh)

    scores = jnp.einsum('bhqd,bhkd->bhqk', Q4, K4, precision=hp) / jnp.sqrt(jnp.float32(D))
    attn = jax.nn.softmax(scores, axis=-1)
    out = jnp.einsum('bhqk,bhkd->bhqd', attn, V4, precision=hp).reshape(B, 1, D)
    return out, attn


if __name__ == "__main__":
    B, P, d_model, d_txt, n_heads = 2, 16, 32, 64, 8

    root = jax.random.PRNGKey(0)
    ks = jax.random.split(root, 8)
    seq_features = jax.random.normal(ks[0], (B, 1, P, d_model), jnp.float32)
    text_features = jax.random.normal(ks[1], (B, 1, d_txt), jnp.float32)
    params = {
        "wq": jax.random.normal(ks[2], (d_txt, d_model), jnp.float32) / jnp.sqrt(jnp.float32(d_txt)),
        "bq": 0.1 * jax.random.normal(ks[3], (d_model,), jnp.float32),
        "wk": jax.random.normal(ks[4], (d_model, d_model), jnp.float32) / jnp.sqrt(jnp.float32(d_model)),
        "bk": 0.1 * jax.random.normal(ks[5], (d_model,), jnp.float32),
        "wv": jax.random.normal(ks[6], (d_model, d_model), jnp.float32) / jnp.sqrt(jnp.float32(d_model)),
        "bv": 0.1 * jax.random.normal(ks[7], (d_model,), jnp.float32),
    }

    attn_output, attn_weights = cross_attention_forward(
        seq_features, text_features, params, n_heads)
    attn_output = jax.block_until_ready(attn_output)
    attn_weights = jax.block_until_ready(attn_weights)

    ref_out, ref_attn = _reference(seq_features, text_features, params, n_heads)

    assert attn_output.shape == (B, 1, d_model)
    assert attn_weights.shape == (B, n_heads, 1, P)
    assert bool(jnp.all(jnp.isfinite(attn_output)))
    assert jnp.allclose(attn_output, ref_out, rtol=5e-3, atol=5e-3)
    assert jnp.allclose(attn_weights, ref_attn, rtol=5e-3, atol=5e-3)

    print("KERNEL_OK")
</pallas_src>

<mosaic_0001>
module attributes {stable_mosaic.version = 11 : i64} {
  func.func @_cross_attn_kernel(%arg0: i32, %arg1: memref<2x64xf32, #tpu.memory_space<vmem>>, %arg2: memref<32x32xf32, #tpu.memory_space<vmem>>, %arg3: memref<64x32xf32, #tpu.memory_space<vmem>>, %arg4: memref<1x32xf32, #tpu.memory_space<vmem>>, %arg5: memref<32x64xf32, #tpu.memory_space<vmem>>, %arg6: memref<1x64xf32, #tpu.memory_space<vmem>>, %arg7: memref<32x2xf32, #tpu.memory_space<vmem>>, %arg8: memref<2x32xf32, #tpu.memory_space<vmem>>, %arg9: memref<32x32xf32, #tpu.memory_space<vmem>>, %arg10: memref<32x32xf32, #tpu.memory_space<vmem>>, %arg11: memref<32x8xf32, #tpu.memory_space<vmem>>, %arg12: memref<8x32xf32, #tpu.memory_space<vmem>>, %arg13: memref<32x32xf32, #tpu.memory_space<vmem>>, %arg14: memref<2x32xf32, #tpu.memory_space<vmem>>, %arg15: memref<32x8xf32, #tpu.memory_space<vmem>>) attributes {dimension_semantics = [#tpu.dimension_semantics<parallel>], iteration_bounds = array<i64: 1>, scalar_prefetch = 0 : i64, scratch_operands = 0 : i64, tpu.core_type = #tpu.core_type<tc>, window_params = [{transform_indices = @transform_0, window_bounds = array<i64: 2, 64>}, {transform_indices = @transform_1, window_bounds = array<i64: 32, 32>}, {pipeline_mode = #tpu.pipeline_mode<synchronous>, transform_indices = @transform_2, window_bounds = array<i64: 64, 32>}, {pipeline_mode = #tpu.pipeline_mode<synchronous>, transform_indices = @transform_3, window_bounds = array<i64: 1, 32>}, {pipeline_mode = #tpu.pipeline_mode<synchronous>, transform_indices = @transform_4, window_bounds = array<i64: 32, 64>}, {pipeline_mode = #tpu.pipeline_mode<synchronous>, transform_indices = @transform_5, window_bounds = array<i64: 1, 64>}, {pipeline_mode = #tpu.pipeline_mode<synchronous>, transform_indices = @transform_6, window_bounds = array<i64: 32, 2>}, {pipeline_mode = #tpu.pipeline_mode<synchronous>, transform_indices = @transform_7, window_bounds = array<i64: 2, 32>}, {pipeline_mode = #tpu.pipeline_mode<synchronous>, transform_indices = @transform_8, window_bounds = array<i64: 32, 32>}, {pipeline_mode = #tpu.pipeline_mode<synchronous>, transform_indices = @transform_9, window_bounds = array<i64: 32, 32>}, {pipeline_mode = #tpu.pipeline_mode<synchronous>, transform_indices = @transform_10, window_bounds = array<i64: 32, 8>}, {pipeline_mode = #tpu.pipeline_mode<synchronous>, transform_indices = @transform_11, window_bounds = array<i64: 8, 32>}, {pipeline_mode = #tpu.pipeline_mode<synchronous>, transform_indices = @transform_12, window_bounds = array<i64: 32, 32>}, {transform_indices = @transform_13, window_bounds = array<i64: 2, 32>}, {transform_indices = @transform_14, window_bounds = array<i64: 32, 8>}]} {
    %c0 = arith.constant 0 : index
    %c0_0 = arith.constant 0 : index
    %0 = vector.load %arg1[%c0, %c0_0] : memref<2x64xf32, #tpu.memory_space<vmem>>, vector<2x64xf32>
    %c0_1 = arith.constant 0 : index
    %c0_2 = arith.constant 0 : index
    %1 = vector.load %arg3[%c0_1, %c0_2] : memref<64x32xf32, #tpu.memory_space<vmem>>, vector<64x32xf32>
    %cst = arith.constant dense<0.000000e+00> : vector<2x32xf32>
    %2 = tpu.matmul %0, %1, %cst {dimension_numbers = #tpu.dot_dimension_numbers<[1], [0], [0], [1], [0, 0, 1, 1], [], []>} : vector<2x64xf32>, vector<64x32xf32>, vector<2x32xf32> -> vector<2x32xf32>
    %c0_3 = arith.constant 0 : index
    %c0_4 = arith.constant 0 : index
    %3 = vector.load %arg4[%c0_3, %c0_4] : memref<1x32xf32, #tpu.memory_space<vmem>>, vector<1x32xf32>
    %4 = vector.broadcast %3 : vector<1x32xf32> to vector<2x32xf32>
    %5 = arith.addf %2, %4 : vector<2x32xf32>
    %c0_5 = arith.constant 0 : index
    %c0_6 = arith.constant 0 : index
    %6 = vector.load %arg2[%c0_5, %c0_6] : memref<32x32xf32, #tpu.memory_space<vmem>>, vector<32x32xf32>
    %c0_7 = arith.constant 0 : index
    %c0_8 = arith.constant 0 : index
    %7 = vector.load %arg5[%c0_7, %c0_8] : memref<32x64xf32, #tpu.memory_space<vmem>>, vector<32x64xf32>
    %cst_9 = arith.constant dense<0.000000e+00> : vector<32x64xf32>
    %8 = tpu.matmul %6, %7, %cst_9 {dimension_numbers = #tpu.dot_dimension_numbers<[1], [0], [0], [1], [0, 0, 1, 1], [], []>} : vector<32x32xf32>, vector<32x64xf32>, vector<32x64xf32> -> vector<32x64xf32>
    %c0_10 = arith.constant 0 : index
    %c0_11 = arith.constant 0 : index
    %9 = vector.load %arg6[%c0_10, %c0_11] : memref<1x64xf32, #tpu.memory_space<vmem>>, vector<1x64xf32>
    %10 = vector.broadcast %9 : vector<1x64xf32> to vector<32x64xf32>
    %11 = arith.addf %8, %10 : vector<32x64xf32>
    %12 = vector.extract_strided_slice %11 {offsets = [0, 0], sizes = [32, 32], strides = [1, 1]} : vector<32x64xf32> to vector<32x32xf32>
    %13 = vector.extract_strided_slice %11 {offsets = [0, 32], sizes = [32, 32], strides = [1, 1]} : vector<32x64xf32> to vector<32x32xf32>
    %c0_12 = arith.constant 0 : index
    %c0_13 = arith.constant 0 : index
    %14 = vector.load %arg7[%c0_12, %c0_13] : memref<32x2xf32, #tpu.memory_space<vmem>>, vector<32x2xf32>
    %cst_14 = arith.constant dense<0.000000e+00> : vector<32x32xf32>
    %15 = tpu.matmul %14, %5, %cst_14 {dimension_numbers = #tpu.dot_dimension_numbers<[1], [0], [0], [1], [0, 0, 1, 1], [], []>} : vector<32x2xf32>, vector<2x32xf32>, vector<32x32xf32> -> vector<32x32xf32>
    %c0_15 = arith.constant 0 : index
    %c0_16 = arith.constant 0 : index
    %16 = vector.load %arg9[%c0_15, %c0_16] : memref<32x32xf32, #tpu.memory_space<vmem>>, vector<32x32xf32>
    %17 = arith.mulf %15, %16 : vector<32x32xf32>
    %c0_17 = arith.constant 0 : index
    %c0_18 = arith.constant 0 : index
    %18 = vector.load %arg10[%c0_17, %c0_18] : memref<32x32xf32, #tpu.memory_space<vmem>>, vector<32x32xf32>
    %cst_19 = arith.constant dense<0.000000e+00> : vector<32x32xf32>
    %19 = tpu.matmul %17, %18, %cst_19 {dimension_numbers = #tpu.dot_dimension_numbers<[1], [0], [0], [1], [0, 0, 1, 1], [], []>} : vector<32x32xf32>, vector<32x32xf32>, vector<32x32xf32> -> vector<32x32xf32>
    %20 = arith.mulf %12, %19 : vector<32x32xf32>
    %c0_20 = arith.constant 0 : index
    %c0_21 = arith.constant 0 : index
    %21 = vector.load %arg11[%c0_20, %c0_21] : memref<32x8xf32, #tpu.memory_space<vmem>>, vector<32x8xf32>
    %cst_22 = arith.constant dense<0.000000e+00> : vector<32x8xf32>
    %22 = tpu.matmul %20, %21, %cst_22 {dimension_numbers = #tpu.dot_dimension_numbers<[1], [0], [0], [1], [0, 0, 1, 1], [], []>} : vector<32x32xf32>, vector<32x8xf32>, vector<32x8xf32> -> vector<32x8xf32>
    %cst_23 = arith.constant 0.176776692 : f32
    %23 = vector.broadcast %cst_23 : f32 to vector<32x8xf32>
    %24 = arith.mulf %22, %23 : vector<32x8xf32>
    %25 = vector.shape_cast %24 : vector<32x8xf32> to vector<1x32x8xf32>
    %cst_24 = arith.constant dense<0xFF800000> : vector<1xf32>
    %26 = vector.multi_reduction <maximumf>, %25, %cst_24 [1, 2] : vector<1x32x8xf32> to vector<1xf32>
    %27 = vector.shape_cast %26 : vector<1xf32> to vector<1x1x1xf32>
    %28 = vector.extract %27[0, 0, 0] : f32 from vector<1x1x1xf32>
    %29 = vector.broadcast %28 : f32 to vector<32x8xf32>
    %30 = arith.subf %24, %29 : vector<32x8xf32>
    %31 = math.exp %30 : vector<32x8xf32>
    %c0_25 = arith.constant 0 : index
    %c0_26 = arith.constant 0 : index
    %32 = vector.load %arg13[%c0_25, %c0_26] : memref<32x32xf32, #tpu.memory_space<vmem>>, vector<32x32xf32>
    %cst_27 = arith.constant dense<0.000000e+00> : vector<32x8xf32>
    %33 = tpu.matmul %32, %31, %cst_27 {dimension_numbers = #tpu.dot_dimension_numbers<[1], [0], [0], [1], [0, 0, 1, 1], [], []>} : vector<32x32xf32>, vector<32x8xf32>, vector<32x8xf32> -> vector<32x8xf32>
    %cst_28 = arith.constant dense<0.000000e+00> : vector<32xf32>
    %34 = vector.multi_reduction <add>, %33, %cst_28 [1] : vector<32x8xf32> to vector<32xf32>
    %35 = vector.shape_cast %34 : vector<32xf32> to vector<32x1xf32>
    %36 = vector.broadcast %35 : vector<32x1xf32> to vector<32x8xf32>
    %37 = arith.divf %31, %36 : vector<32x8xf32>
    %c0_29 = arith.constant 0 : index
    %c0_30 = arith.constant 0 : index
    %38 = vector.load %arg15[%c0_29, %c0_30] : memref<32x8xf32, #tpu.memory_space<vmem>>, vector<32x8xf32>
    tpu.vector_store %arg15[%c0_29, %c0_30], %37 {strides = array<i32>} : memref<32x8xf32, #tpu.memory_space<vmem>>, vector<32x8xf32>,
    %c0_31 = arith.constant 0 : index
    %c0_32 = arith.constant 0 : index
    %39 = vector.load %arg12[%c0_31, %c0_32] : memref<8x32xf32, #tpu.memory_space<vmem>>, vector<8x32xf32>
    %cst_33 = arith.constant dense<0.000000e+00> : vector<32x32xf32>
    %40 = tpu.matmul %37, %39, %cst_33 {dimension_numbers = #tpu.dot_dimension_numbers<[1], [0], [0], [1], [0, 0, 1, 1], [], []>} : vector<32x8xf32>, vector<8x32xf32>, vector<32x32xf32> -> vector<32x32xf32>
    %41 = arith.mulf %40, %13 : vector<32x32xf32>
    %c0_34 = arith.constant 0 : index
    %c0_35 = arith.constant 0 : index
    %42 = vector.load %arg10[%c0_34, %c0_35] : memref<32x32xf32, #tpu.memory_space<vmem>>, vector<32x32xf32>
    %cst_36 = arith.constant dense<0.000000e+00> : vector<32x32xf32>
    %43 = tpu.matmul %41, %42, %cst_36 {dimension_numbers = #tpu.dot_dimension_numbers<[1], [0], [0], [1], [0, 0, 1, 1], [], []>} : vector<32x32xf32>, vector<32x32xf32>, vector<32x32xf32> -> vector<32x32xf32>
    %c0_37 = arith.constant 0 : index
    %c0_38 = arith.constant 0 : index
    %44 = vector.load %arg8[%c0_37, %c0_38] : memref<2x32xf32, #tpu.memory_space<vmem>>, vector<2x32xf32>
    %c0_39 = arith.constant 0 : index
    %c0_40 = arith.constant 0 : index
    %45 = vector.load %arg9[%c0_39, %c0_40] : memref<32x32xf32, #tpu.memory_space<vmem>>, vector<32x32xf32>
    %46 = arith.mulf %43, %45 : vector<32x32xf32>
    %cst_41 = arith.constant dense<0.000000e+00> : vector<2x32xf32>
    %47 = tpu.matmul %44, %46, %cst_41 {dimension_numbers = #tpu.dot_dimension_numbers<[1], [0], [0], [1], [0, 0, 1, 1], [], []>} : vector<2x32xf32>, vector<32x32xf32>, vector<2x32xf32> -> vector<2x32xf32>
    %c0_42 = arith.constant 0 : index
    %c0_43 = arith.constant 0 : index
    %48 = vector.load %arg14[%c0_42, %c0_43] : memref<2x32xf32, #tpu.memory_space<vmem>>, vector<2x32xf32>
    tpu.vector_store %arg14[%c0_42, %c0_43], %47 {strides = array<i32>} : memref<2x32xf32, #tpu.memory_space<vmem>>, vector<2x32xf32>,
    return
  }
  func.func @transform_0(%arg0: i32) -> (i32, i32) {
    %c0_i32 = arith.constant 0 : i32
    %c0_i32_0 = arith.constant 0 : i32
    return %arg0, %c0_i32 : i32, i32
  }
  func.func @transform_1(%arg0: i32) -> (i32, i32) {
    %c0_i32 = arith.constant 0 : i32
    %c0_i32_0 = arith.constant 0 : i32
    return %arg0, %c0_i32 : i32, i32
  }
  func.func @transform_2(%arg0: i32) -> (i32, i32) {
    %c0_i32 = arith.constant 0 : i32
    %c0_i32_0 = arith.constant 0 : i32
    %c0_i32_1 = arith.constant 0 : i32
    return %c0_i32, %c0_i32_0 : i32, i32
  }
  func.func @transform_3(%arg0: i32) -> (i32, i32) {
    %c0_i32 = arith.constant 0 : i32
    %c0_i32_0 = arith.constant 0 : i32
    %c0_i32_1 = arith.constant 0 : i32
    return %c0_i32, %c0_i32_0 : i32, i32
  }
  func.func @transform_4(%arg0: i32) -> (i32, i32) {
    %c0_i32 = arith.constant 0 : i32
    %c0_i32_0 = arith.constant 0 : i32
    %c0_i32_1 = arith.constant 0 : i32
    return %c0_i32, %c0_i32_0 : i32, i32
  }
  func.func @transform_5(%arg0: i32) -> (i32, i32) {
    %c0_i32 = arith.constant 0 : i32
    %c0_i32_0 = arith.constant 0 : i32
    %c0_i32_1 = arith.constant 0 : i32
    return %c0_i32, %c0_i32_0 : i32, i32
  }
  func.func @transform_6(%arg0: i32) -> (i32, i32) {
    %c0_i32 = arith.constant 0 : i32
    %c0_i32_0 = arith.constant 0 : i32
    %c0_i32_1 = arith.constant 0 : i32
    return %c0_i32, %c0_i32_0 : i32, i32
  }
  func.func @transform_7(%arg0: i32) -> (i32, i32) {
    %c0_i32 = arith.constant 0 : i32
    %c0_i32_0 = arith.constant 0 : i32
    %c0_i32_1 = arith.constant 0 : i32
    return %c0_i32, %c0_i32_0 : i32, i32
  }
  func.func @transform_8(%arg0: i32) -> (i32, i32) {
    %c0_i32 = arith.constant 0 : i32
    %c0_i32_0 = arith.constant 0 : i32
    %c0_i32_1 = arith.constant 0 : i32
    return %c0_i32, %c0_i32_0 : i32, i32
  }
  func.func @transform_9(%arg0: i32) -> (i32, i32) {
    %c0_i32 = arith.constant 0 : i32
    %c0_i32_0 = arith.constant 0 : i32
    %c0_i32_1 = arith.constant 0 : i32
    return %c0_i32, %c0_i32_0 : i32, i32
  }
  func.func @transform_10(%arg0: i32) -> (i32, i32) {
    %c0_i32 = arith.constant 0 : i32
    %c0_i32_0 = arith.constant 0 : i32
    %c0_i32_1 = arith.constant 0 : i32
    return %c0_i32, %c0_i32_0 : i32, i32
  }
  func.func @transform_11(%arg0: i32) -> (i32, i32) {
    %c0_i32 = arith.constant 0 : i32
    %c0_i32_0 = arith.constant 0 : i32
    %c0_i32_1 = arith.constant 0 : i32
    return %c0_i32, %c0_i32_0 : i32, i32
  }
  func.func @transform_12(%arg0: i32) -> (i32, i32) {
    %c0_i32 = arith.constant 0 : i32
    %c0_i32_0 = arith.constant 0 : i32
    %c0_i32_1 = arith.constant 0 : i32
    return %c0_i32, %c0_i32_0 : i32, i32
  }
  func.func @transform_13(%arg0: i32) -> (i32, i32) {
    %c0_i32 = arith.constant 0 : i32
    %c0_i32_0 = arith.constant 0 : i32
    return %arg0, %c0_i32 : i32, i32
  }
  func.func @transform_14(%arg0: i32) -> (i32, i32) {
    %c0_i32 = arith.constant 0 : i32
    %c0_i32_0 = arith.constant 0 : i32
    return %arg0, %c0_i32 : i32, i32
  }
}

</mosaic_0001>

<llo_original>
// kernel: tpu_custom_call.1
$region0: #{tpu_custom_call.1}
  #allocation0 [shape = 'u32[]', space=smem, size = 0x4, offset = 0x4, fixed_abs, tag = 'smem constant byte address 0x4 - core index']
  #allocation1 [shape = 'u32[144,128]{1,0:T(1,128)}', space=vmem, size = 0x12000, scoped, tag = 'internal scratch']
  %s0 = inlined_call_operand.hbm [shape: f32[2,64], index: 0, kind: input, shape index: {}]
  %s1 = inlined_call_operand.vmem [shape: f32[32,32], index: 1, kind: input, shape index: {}]
  %s2 = inlined_call_operand.vmem [shape: f32[64,32], index: 2, kind: input, shape index: {}]
  %s3 = inlined_call_operand.hbm [shape: f32[1,32], index: 3, kind: input, shape index: {}]
  %s4 = inlined_call_operand.vmem [shape: f32[32,64], index: 4, kind: input, shape index: {}]
  %s5 = inlined_call_operand.hbm [shape: f32[1,64], index: 5, kind: input, shape index: {}]
  %s6 = inlined_call_operand.vmem [shape: f32[32,2], index: 6, kind: input, shape index: {}]
  %s7 = inlined_call_operand.vmem [shape: f32[2,32], index: 7, kind: input, shape index: {}]
  %s8 = inlined_call_operand.vmem [shape: f32[32,32], index: 8, kind: input, shape index: {}]
  %s9 = inlined_call_operand.vmem [shape: f32[32,32], index: 9, kind: input, shape index: {}]
  %s10 = inlined_call_operand.vmem [shape: f32[32,8], index: 10, kind: input, shape index: {}]
  %s11 = inlined_call_operand.vmem [shape: f32[8,32], index: 11, kind: input, shape index: {}]
  %s12 = inlined_call_operand.vmem [shape: f32[32,32], index: 12, kind: input, shape index: {}]
  %s13 = inlined_call_operand.hbm [shape: f32[2,32], index: 13, kind: output, shape index: {0}]
  %s14 = inlined_call_operand.vmem [shape: f32[32,8], index: 14, kind: output, shape index: {1}]
  %15 = xla_tuple %s13, %s14
  %s16 = sld [smem:[#allocation0]]
  $region82: #{tpu_custom_call.1} parent=0
    _
  %s18 = ssub.s32 1, %s16
  %s19 = scalar_select 0, %s18, %s16
  $region1: #{tpu_custom_call.1} parent=0
    #allocation2 [shape = 'u8[1024]{0}', space=vmem, size = 0x400, scoped, tag = 'input window, operand 0, single buffered']
    #allocation3 [shape = 's32[1]{0}', space=sflag, size = 0x4, scoped, tag = 'scoped memory for tpu_custom_call.1']
    #allocation4 [shape = 's32[1]{0}', space=sflag, size = 0x4, scoped, tag = 'scoped memory for tpu_custom_call.1']
    #allocation5 [shape = 'u8[512]{0}', space=vmem, size = 0x400, scoped, tag = 'input window, operand 3, single buffered']
    #allocation6 [shape = 's32[1]{0}', space=sflag, size = 0x4, scoped, tag = 'scoped memory for tpu_custom_call.1']
    #allocation7 [shape = 'u8[512]{0}', space=vmem, size = 0x400, scoped, tag = 'input window, operand 5, single buffered']
    #allocation8 [shape = 'u8[1024]{0}', space=vmem, size = 0x400, scoped, tag = 'output window, operand 0, single buffered']
    %20 = vsyncpa [#allocation3], 0
    %21 = vsyncpa [#allocation6], 0
    %22 = vsyncpa [#allocation4], 0
    // Predicated region
    $region2: #{tpu_custom_call.1} parent=1 // pred_check
      _
    $region3: #{tpu_custom_call.1} parent=1 // pred_check_branch
      %24 = sbr.rel (0) target = $region5
    $region4: #{tpu_custom_call.1} parent=1 // pred_region
      %s26 = ssub.s32 32, 32
      %27 = vsyncadd [#allocation3], %s26
      %s29 = sshll.u32 [#allocation2], 4
      %s30 = int_to_ptr.vmem [resolvable:$true] %s29
      %32 = dma.hbm_to_vmem [thread:$0]  %s0, 32, %s30, [#allocation3]
    $region5: #{tpu_custom_call.1} parent=1 // pred_fallthru
      _
    // Predicated region
    $region6: #{tpu_custom_call.1} parent=1 // pred_check
      _
    $region7: #{tpu_custom_call.1} parent=1 // pred_check_branch
      %34 = sbr.rel (0) target = $region9
    $region8: #{tpu_custom_call.1} parent=1 // pred_region
      _
    $region9: #{tpu_custom_call.1} parent=1 // pred_fallthru
      _
    // Predicated region
    $region10: #{tpu_custom_call.1} parent=1 // pred_check
      _
    $region11: #{tpu_custom_call.1} parent=1 // pred_check_branch
      %36 = sbr.rel (0) target = $region13
    $region12: #{tpu_custom_call.1} parent=1 // pred_region
      _
    $region13: #{tpu_custom_call.1} parent=1 // pred_fallthru
      _
    // Predicated region
    $region14: #{tpu_custom_call.1} parent=1 // pred_check
      _
    $region15: #{tpu_custom_call.1} parent=1 // pred_check_branch
      %38 = sbr.rel (0) target = $region17
    $region16: #{tpu_custom_call.1} parent=1 // pred_region
      %s40 = ssub.s32 16, 16
      %41 = vsyncadd [#allocation6], %s40
      %s43 = sshll.u32 [#allocation5], 4
      %s44 = int_to_ptr.vmem [resolvable:$true] %s43
      %46 = dma.hbm_to_vmem [thread:$0]  %s3, 16, %s44, [#allocation6]
    $region17: #{tpu_custom_call.1} parent=1 // pred_fallthru
      _
    // Predicated region
    $region18: #{tpu_custom_call.1} parent=1 // pred_check
      _
    $region19: #{tpu_custom_call.1} parent=1 // pred_check_branch
      %48 = sbr.rel (0) target = $region21
    $region20: #{tpu_custom_call.1} parent=1 // pred_region
      _
    $region21: #{tpu_custom_call.1} parent=1 // pred_fallthru
      _
    // Predicated region
    $region22: #{tpu_custom_call.1} parent=1 // pred_check
      _
    $region23: #{tpu_custom_call.1} parent=1 // pred_check_branch
      %50 = sbr.rel (0) target = $region25
    $region24: #{tpu_custom_call.1} parent=1 // pred_region
      %s52 = ssub.s32 16, 16
      %53 = vsyncadd [#allocation6], %s52
      %s55 = sshll.u32 [#allocation7], 4
      %s56 = int_to_ptr.vmem [resolvable:$true] %s55
      %58 = dma.hbm_to_vmem [thread:$0]  %s5, 16, %s56, [#allocation6]
    $region25: #{tpu_custom_call.1} parent=1 // pred_fallthru
      _
    // Predicated region
    $region26: #{tpu_custom_call.1} parent=1 // pred_check
      _
    $region27: #{tpu_custom_call.1} parent=1 // pred_check_branch
      %60 = sbr.rel (0) target = $region29
    $region28: #{tpu_custom_call.1} parent=1 // pred_region
      _
    $region29: #{tpu_custom_call.1} parent=1 // pred_fallthru
      _
    // Predicated region
    $region30: #{tpu_custom_call.1} parent=1 // pred_check
      _
    $region31: #{tpu_custom_call.1} parent=1 // pred_check_branch
      %62 = sbr.rel (0) target = $region33
    $region32: #{tpu_custom_call.1} parent=1 // pred_region
      _
    $region33: #{tpu_custom_call.1} parent=1 // pred_fallthru
      _
    // Predicated region
    $region34: #{tpu_custom_call.1} parent=1 // pred_check
      _
    $region35: #{tpu_custom_call.1} parent=1 // pred_check_branch
      %64 = sbr.rel (0) target = $region37
    $region36: #{tpu_custom_call.1} parent=1 // pred_region
      _
    $region37: #{tpu_custom_call.1} parent=1 // pred_fallthru
      _
    // Predicated region
    $region38: #{tpu_custom_call.1} parent=1 // pred_check
      _
    $region39: #{tpu_custom_call.1} parent=1 // pred_check_branch
      %66 = sbr.rel (0) target = $region41
    $region40: #{tpu_custom_call.1} parent=1 // pred_region
      _
    $region41: #{tpu_custom_call.1} parent=1 // pred_fallthru
      _
    // Predicated region
    $region42: #{tpu_custom_call.1} parent=1 // pred_check
      _
    $region43: #{tpu_custom_call.1} parent=1 // pred_check_branch
      %68 = sbr.rel (0) target = $region45
    $region44: #{tpu_custom_call.1} parent=1 // pred_region
      _
    $region45: #{tpu_custom_call.1} parent=1 // pred_fallthru
      _
    // Predicated region
    $region46: #{tpu_custom_call.1} parent=1 // pred_check
      _
    $region47: #{tpu_custom_call.1} parent=1 // pred_check_branch
      %70 = sbr.rel (0) target = $region49
    $region48: #{tpu_custom_call.1} parent=1 // pred_region
      _
    $region49: #{tpu_custom_call.1} parent=1 // pred_fallthru
      _
    // Predicated region
    $region50: #{tpu_custom_call.1} parent=1 // pred_check
      _
    $region51: #{tpu_custom_call.1} parent=1 // pred_check_branch
      %72 = sbr.rel (0) target = $region53
    $region52: #{tpu_custom_call.1} parent=1 // pred_region
      _
    $region53: #{tpu_custom_call.1} parent=1 // pred_fallthru
      _
    // Predicated region
    $region54: #{tpu_custom_call.1} parent=1 // pred_check
      _
    $region55: #{tpu_custom_call.1} parent=1 // pred_check_branch
      %74 = sbr.rel (0) target = $region57
    $region56: #{tpu_custom_call.1} parent=1 // pred_region
      %75 = dma.done [#allocation3], 32
    $region57: #{tpu_custom_call.1} parent=1 // pred_fallthru
      _
    // Predicated region
    $region58: #{tpu_custom_call.1} parent=1 // pred_check
      _
    $region59: #{tpu_custom_call.1} parent=1 // pred_check_branch
      %77 = sbr.rel (0) target = $region61
    $region60: #{tpu_custom_call.1} parent=1 // pred_region
      %78 = dma.done [#allocation6], 16
    $region61: #{tpu_custom_call.1} parent=1 // pred_fallthru
      _
    // Predicated region
    $region62: #{tpu_custom_call.1} parent=1 // pred_check
      _
    $region63: #{tpu_custom_call.1} parent=1 // pred_check_branch
      %80 = sbr.rel (0) target = $region65
    $region64: #{tpu_custom_call.1} parent=1 // pred_region
      %81 = dma.done [#allocation6], 16
    $region65: #{tpu_custom_call.1} parent=1 // pred_fallthru
      _
    %v82 = vld [vmem:[#allocation2] sm:$0x3]
    %v83 = vld [vmem:[%s2] sm:$0xff]
    %v84 = vld [vmem:[%s2 + $0x8] sm:$0xff]
    %v85 = vld [vmem:[%s2 + $0x10] sm:$0xff]
    %v86 = vld [vmem:[%s2 + $0x18] sm:$0xff]
    %v87 = vld [vmem:[%s2 + $0x20] sm:$0xff]
    %v88 = vld [vmem:[%s2 + $0x28] sm:$0xff]
    %v89 = vld [vmem:[%s2 + $0x30] sm:$0xff]
    %v90 = vld [vmem:[%s2 + $0x38] sm:$0xff]
    %v91 = vld [vmem:[#allocation5] sm:$0x1]
    %v93 = vlaneseq
    %v94 = vshrl.u32 %v93, 7
    %v95 = vsub.s32 0, %v94
    %v96 = vrot.slane %v91, %v95
    %vm98 = vcmask 523264
    %v100 = vsel %vm98, %v82, 0
    %102 = vmatprep.subr.mxu0 0.0
    %103 = vmatpush1.msra.mxu0 0.0
    %104 = vmatprep.subr.mxu0 0.0
    %105 = vmatpush1.msra.mxu0 0.0
    %106 = vmatprep.subr.mxu0 0.0
    %107 = vmatpush1.msra.mxu0 0.0
    %108 = vmatprep.subr.mxu0 0.0
    %109 = vmatpush1.msra.mxu0 0.0
    %110 = vmatprep.subr.mxu0 0.0
    %111 = vmatpush1.msra.mxu0 0.0
    %112 = vmatprep.subr.mxu0 0.0
    %113 = vmatpush1.msra.mxu0 0.0
    %114 = vmatprep.subr.mxu0 0.0
    %115 = vmatpush1.msra.mxu0 0.0
    %116 = vmatprep.subr.mxu0 0.0
    %117 = vmatpush1.msra.mxu0 0.0
    %118 = vmatprep.subr.mxu0 0.0
    %119 = vmatpush1.msra.mxu0 %v90
    %120 = vmatprep.subr.mxu0 0.0
    %121 = vmatpush1.msra.mxu0 %v89
    %122 = vmatprep.subr.mxu0 0.0
    %123 = vmatpush1.msra.mxu0 %v88
    %124 = vmatprep.subr.mxu0 0.0
    %125 = vmatpush1.msra.mxu0 %v87
    %126 = vmatprep.subr.mxu0 0.0
    %127 = vmatpush1.msra.mxu0 %v86
    %128 = vmatprep.subr.mxu0 0.0
    %129 = vmatpush1.msra.mxu0 %v85
    %130 = vmatprep.subr.mxu0 0.0
    %131 = vmatpush1.msra.mxu0 %v84
    %132 = vmatprep.subr.mxu0 0.0
    %133 = vmatpush1.msra.mxu0 %v83
    %134 = vmatprep.subr.mxu0 0.0
    %135 = vmatpush2.msra.mxu0 0.0
    %136 = vmatprep.subr.mxu0 0.0
    %137 = vmatpush2.msra.mxu0 0.0
    %138 = vmatprep.subr.mxu0 0.0
    %139 = vmatpush2.msra.mxu0 0.0
    %140 = vmatprep.subr.mxu0 0.0
    %141 = vmatpush2.msra.mxu0 0.0
    %142 = vmatprep.subr.mxu0 0.0
    %143 = vmatpush2.msra.mxu0 0.0
    %144 = vmatprep.subr.mxu0 0.0
    %145 = vmatpush2.msra.mxu0 0.0
    %146 = vmatprep.subr.mxu0 0.0
    %147 = vmatpush2.msra.mxu0 0.0
    %148 = vmatprep.subr.mxu0 0.0
    %149 = vmatpush2.msra.mxu0 0.0
    %150 = vmatprep.subr.mxu0 0.0
    %151 = vmatpush2.msra.mxu0 0.0
    %152 = vmatprep.subr.mxu0 0.0
    %153 = vmatpush2.msra.mxu0 0.0
    %154 = vmatprep.subr.mxu0 0.0
    %155 = vmatpush2.msra.mxu0 0.0
    %156 = vmatprep.subr.mxu0 0.0
    %157 = vmatpush2.msra.mxu0 0.0
    %158 = vmatprep.subr.mxu0 0.0
    %159 = vmatpush2.msra.mxu0 0.0
    %160 = vmatprep.subr.mxu0 0.0
    %161 = vmatpush2.msra.mxu0 0.0
    %162 = vmatprep.subr.mxu0 0.0
    %163 = vmatpush2.msra.mxu0 0.0
    %164 = vmatprep.subr.mxu0 0.0
    %165 = vmatpush2.msra.mxu0 0.0
    %166 = vmatprep.mubr.f32.mxu0 0.0
    %167 = vmatmul.mubr.f32.gmra.mxu0 %v100
    %v168 = vpop.f32.mrf.mxu0
    %v169 = vadd.f32 %v96, %v168
    %v170 = vpop.f32.mrf.mxu0
    %171 = vdwg.mxu0
    %v172 = vld [vmem:[%s1] sm:$0xff]
    %v173 = vld [vmem:[%s1 + $0x8] sm:$0xff]
    %v174 = vld [vmem:[%s1 + $0x10] sm:$0xff]
    %v175 = vld [vmem:[%s1 + $0x18] sm:$0xff]
    %v176 = vld [vmem:[%s4] sm:$0xff]
    %v177 = vld [vmem:[%s4 + $0x8] sm:$0xff]
    %v178 = vld [vmem:[%s4 + $0x10] sm:$0xff]
    %v179 = vld [vmem:[%s4 + $0x18] sm:$0xff]
    %v180 = vld [vmem:[#allocation7] sm:$0x1]
    %v182 = vlaneseq
    %v183 = vshrl.u32 %v182, 7
    %v184 = vsub.s32 0, %v183
    %v185 = vrot.slane %v180, %v184
    %vm187 = vcmask 261120
    %v189 = vsel %vm187, %v172, 0
    %v192 = vsel %vm187, %v173, 0
    %v195 = vsel %vm187, %v174, 0
    %v198 = vsel %vm187, %v175, 0
    %200 = vmatprep.subr.mxu0 0.0
    %201 = vmatpush1.msra.mxu0 0.0
    %202 = vmatprep.subr.mxu0 0.0
    %203 = vmatpush1.msra.mxu0 0.0
    %204 = vmatprep.subr.mxu0 0.0
    %205 = vmatpush1.msra.mxu0 0.0
    %206 = vmatprep.subr.mxu0 0.0
    %207 = vmatpush1.msra.mxu0 0.0
    %208 = vmatprep.subr.mxu0 0.0
    %209 = vmatpush1.msra.mxu0 0.0
    %210 = vmatprep.subr.mxu0 0.0
    %211 = vmatpush1.msra.mxu0 0.0
    %212 = vmatprep.subr.mxu0 0.0
    %213 = vmatpush1.msra.mxu0 0.0
    %214 = vmatprep.subr.mxu0 0.0
    %215 = vmatpush1.msra.mxu0 0.0
    %216 = vmatprep.subr.mxu0 0.0
    %217 = vmatpush1.msra.mxu0 0.0
    %218 = vmatprep.subr.mxu0 0.0
    %219 = vmatpush1.msra.mxu0 0.0
    %220 = vmatprep.subr.mxu0 0.0
    %221 = vmatpush1.msra.mxu0 0.0
    %222 = vmatprep.subr.mxu0 0.0
    %223 = vmatpush1.msra.mxu0 0.0
    %224 = vmatprep.subr.mxu0 0.0
    %225 = vmatpush1.msra.mxu0 %v179
    %226 = vmatprep.subr.mxu0 0.0
    %227 = vmatpush1.msra.mxu0 %v178
    %228 = vmatprep.subr.mxu0 0.0
    %229 = vmatpush1.msra.mxu0 %v177
    %230 = vmatprep.subr.mxu0 0.0
    %231 = vmatpush1.msra.mxu0 %v176
    %232 = vmatprep.subr.mxu0 0.0
    %233 = vmatpush2.msra.mxu0 0.0
    %234 = vmatprep.subr.mxu0 0.0
    %235 = vmatpush2.msra.mxu0 0.0
    %236 = vmatprep.subr.mxu0 0.0
    %237 = vmatpush2.msra.mxu0 0.0
    %238 = vmatprep.subr.mxu0 0.0
    %239 = vmatpush2.msra.mxu0 0.0
    %240 = vmatprep.subr.mxu0 0.0
    %241 = vmatpush2.msra.mxu0 0.0
    %242 = vmatprep.subr.mxu0 0.0
    %243 = vmatpush2.msra.mxu0 0.0
    %244 = vmatprep.subr.mxu0 0.0
    %245 = vmatpush2.msra.mxu0 0.0
    %246 = vmatprep.subr.mxu0 0.0
    %247 = vmatpush2.msra.mxu0 0.0
    %248 = vmatprep.subr.mxu0 0.0
    %249 = vmatpush2.msra.mxu0 0.0
    %250 = vmatprep.subr.mxu0 0.0
    %251 = vmatpush2.msra.mxu0 0.0
    %252 = vmatprep.subr.mxu0 0.0
    %253 = vmatpush2.msra.mxu0 0.0
    %254 = vmatprep.subr.mxu0 0.0
    %255 = vmatpush2.msra.mxu0 0.0
    %256 = vmatprep.subr.mxu0 0.0
    %257 = vmatpush2.msra.mxu0 0.0
    %258 = vmatprep.subr.mxu0 0.0
    %259 = vmatpush2.msra.mxu0 0.0
    %260 = vmatprep.subr.mxu0 0.0
    %261 = vmatpush2.msra.mxu0 0.0
    %262 = vmatprep.subr.mxu0 0.0
    %263 = vmatpush2.msra.mxu0 0.0
    %264 = vmatprep.mubr.f32.mxu0 0.0
    %265 = vmatmul.mubr.f32.gmra.mxu0 %v189
    %v266 = vpop.f32.mrf.mxu0
    %v267 = vadd.f32 %v185, %v266
    %v268 = vpop.f32.mrf.mxu0
    %269 = vmatprep.mubr.f32.mxu0 0.0
    %270 = vmatmul.mubr.f32.gmra.mxu0 %v192
    %v271 = vpop.f32.mrf.mxu0
    %v272 = vadd.f32 %v185, %v271
    %v273 = vpop.f32.mrf.mxu0
    %274 = vmatprep.mubr.f32.mxu0 0.0
    %275 = vmatmul.mubr.f32.gmra.mxu0 %v195
    %v276 = vpop.f32.mrf.mxu0
    %v277 = vadd.f32 %v185, %v276
    %v278 = vpop.f32.mrf.mxu0
    %279 = vmatprep.mubr.f32.mxu0 0.0
    %280 = vmatmul.mubr.f32.gmra.mxu0 %v198
    %v281 = vpop.f32.mrf.mxu0
    %v282 = vadd.f32 %v185, %v281
    %v283 = vpop.f32.mrf.mxu0
    %284 = vdwg.mxu0
    %v285 = vld [vmem:[%s6] sm:$0xff]
    %v286 = vld [vmem:[%s6 + $0x8] sm:$0xff]
    %v287 = vld [vmem:[%s6 + $0x10] sm:$0xff]
    %v288 = vld [vmem:[%s6 + $0x18] sm:$0xff]
    %vm289 = vcmask 15360
    %v291 = vsel %vm289, %v285, 0
    %v294 = vsel %vm289, %v286, 0
    %v297 = vsel %vm289, %v287, 0
    %v300 = vsel %vm289, %v288, 0
    %vm302 = vcmask 1041408
    %v304 = vsel %vm302, %v169, 0
    %306 = vmatprep.subr.mxu0 0.0
    %307 = vmatpush1.msra.mxu0 0.0
    %308 = vmatprep.subr.mxu0 0.0
    %309 = vmatpush1.msra.mxu0 0.0
    %310 = vmatprep.subr.mxu0 0.0
    %311 = vmatpush1.msra.mxu0 0.0
    %312 = vmatprep.subr.mxu0 0.0
    %313 = vmatpush1.msra.mxu0 0.0
    %314 = vmatprep.subr.mxu0 0.0
    %315 = vmatpush1.msra.mxu0 0.0
    %316 = vmatprep.subr.mxu0 0.0
    %317 = vmatpush1.msra.mxu0 0.0
    %318 = vmatprep.subr.mxu0 0.0
    %319 = vmatpush1.msra.mxu0 0.0
    %320 = vmatprep.subr.mxu0 0.0
    %321 = vmatpush1.msra.mxu0 0.0
    %322 = vmatprep.subr.mxu0 0.0
    %323 = vmatpush1.msra.mxu0 0.0
    %324 = vmatprep.subr.mxu0 0.0
    %325 = vmatpush1.msra.mxu0 0.0
    %326 = vmatprep.subr.mxu0 0.0
    %327 = vmatpush1.msra.mxu0 0.0
    %328 = vmatprep.subr.mxu0 0.0
    %329 = vmatpush1.msra.mxu0 0.0
    %330 = vmatprep.subr.mxu0 0.0
    %331 = vmatpush1.msra.mxu0 0.0
    %332 = vmatprep.subr.mxu0 0.0
    %333 = vmatpush1.msra.mxu0 0.0
    %334 = vmatprep.subr.mxu0 0.0
    %335 = vmatpush1.msra.mxu0 0.0
    %336 = vmatprep.subr.mxu0 0.0
    %337 = vmatpush1.msra.mxu0 %v304
    %338 = vmatprep.subr.mxu0 0.0
    %339 = vmatpush2.msra.mxu0 0.0
    %340 = vmatprep.subr.mxu0 0.0
    %341 = vmatpush2.msra.mxu0 0.0
    %342 = vmatprep.subr.mxu0 0.0
    %343 = vmatpush2.msra.mxu0 0.0
    %344 = vmatprep.subr.mxu0 0.0
    %345 = vmatpush2.msra.mxu0 0.0
    %346 = vmatprep.subr.mxu0 0.0
    %347 = vmatpush2.msra.mxu0 0.0
    %348 = vmatprep.subr.mxu0 0.0
    %349 = vmatpush2.msra.mxu0 0.0
    %350 = vmatprep.subr.mxu0 0.0
    %351 = vmatpush2.msra.mxu0 0.0
    %352 = vmatprep.subr.mxu0 0.0
    %353 = vmatpush2.msra.mxu0 0.0
    %354 = vmatprep.subr.mxu0 0.0
    %355 = vmatpush2.msra.mxu0 0.0
    %356 = vmatprep.subr.mxu0 0.0
    %357 = vmatpush2.msra.mxu0 0.0
    %358 = vmatprep.subr.mxu0 0.0
    %359 = vmatpush2.msra.mxu0 0.0
    %360 = vmatprep.subr.mxu0 0.0
    %361 = vmatpush2.msra.mxu0 0.0
    %362 = vmatprep.subr.mxu0 0.0
    %363 = vmatpush2.msra.mxu0 0.0
    %364 = vmatprep.subr.mxu0 0.0
    %365 = vmatpush2.msra.mxu0 0.0
    %366 = vmatprep.subr.mxu0 0.0
    %367 = vmatpush2.msra.mxu0 0.0
    %368 = vmatprep.subr.mxu0 0.0
    %369 = vmatpush2.msra.mxu0 0.0
    %370 = vmatprep.mubr.f32.mxu0 0.0
    %371 = vmatmul.mubr.f32.gmra.mxu0 %v291
    %v372 = vpop.f32.mrf.mxu0
    %v373 = vadd.f32 0.0, %v372
    %v374 = vpop.f32.mrf.mxu0
    %375 = vmatprep.mubr.f32.mxu0 0.0
    %376 = vmatmul.mubr.f32.gmra.mxu0 %v294
    %v377 = vpop.f32.mrf.mxu0
    %v378 = vadd.f32 0.0, %v377
    %v379 = vpop.f32.mrf.mxu0
    %380 = vmatprep.mubr.f32.mxu0 0.0
    %381 = vmatmul.mubr.f32.gmra.mxu0 %v297
    %v382 = vpop.f32.mrf.mxu0
    %v383 = vadd.f32 0.0, %v382
    %v384 = vpop.f32.mrf.mxu0
    %385 = vmatprep.mubr.f32.mxu0 0.0
    %386 = vmatmul.mubr.f32.gmra.mxu0 %v300
    %v387 = vpop.f32.mrf.mxu0
    %v388 = vadd.f32 0.0, %v387
    %v389 = vpop.f32.mrf.mxu0
    %390 = vdwg.mxu0
    %v391 = vld [vmem:[%s8] sm:$0xff]
    %v392 = vld [vmem:[%s8 + $0x8] sm:$0xff]
    %v393 = vld [vmem:[%s8 + $0x10] sm:$0xff]
    %v394 = vld [vmem:[%s8 + $0x18] sm:$0xff]
    %v395 = vmul.f32 %v373, %v391
    %v396 = vmul.f32 %v378, %v392
    %v397 = vmul.f32 %v383, %v393
    %v398 = vmul.f32 %v388, %v394
    %v399 = vld [vmem:[%s9] sm:$0xff]
    %v400 = vld [vmem:[%s9 + $0x8] sm:$0xff]
    %v401 = vld [vmem:[%s9 + $0x10] sm:$0xff]
    %v402 = vld [vmem:[%s9 + $0x18] sm:$0xff]
    %v404 = vsel %vm187, %v395, 0
    %v407 = vsel %vm187, %v396, 0
    %v410 = vsel %vm187, %v397, 0
    %v413 = vsel %vm187, %v398, 0
    %415 = vmatprep.subr.mxu0 0.0
    %416 = vmatpush1.msra.mxu0 0.0
    %417 = vmatprep.subr.mxu0 0.0
    %418 = vmatpush1.msra.mxu0 0.0
    %419 = vmatprep.subr.mxu0 0.0
    %420 = vmatpush1.msra.mxu0 0.0
    %421 = vmatprep.subr.mxu0 0.0
    %422 = vmatpush1.msra.mxu0 0.0
    %423 = vmatprep.subr.mxu0 0.0
    %424 = vmatpush1.msra.mxu0 0.0
    %425 = vmatprep.subr.mxu0 0.0
    %426 = vmatpush1.msra.mxu0 0.0
    %427 = vmatprep.subr.mxu0 0.0
    %428 = vmatpush1.msra.mxu0 0.0
    %429 = vmatprep.subr.mxu0 0.0
    %430 = vmatpush1.msra.mxu0 0.0
    %431 = vmatprep.subr.mxu0 0.0
    %432 = vmatpush1.msra.mxu0 0.0
    %433 = vmatprep.subr.mxu0 0.0
    %434 = vmatpush1.msra.mxu0 0.0
    %435 = vmatprep.subr.mxu0 0.0
    %436 = vmatpush1.msra.mxu0 0.0
    %437 = vmatprep.subr.mxu0 0.0
    %438 = vmatpush1.msra.mxu0 0.0
    %439 = vmatprep.subr.mxu0 0.0
    %440 = vmatpush1.msra.mxu0 %v402
    %441 = vmatprep.subr.mxu0 0.0
    %442 = vmatpush1.msra.mxu0 %v401
    %443 = vmatprep.subr.mxu0 0.0
    %444 = vmatpush1.msra.mxu0 %v400
    %445 = vmatprep.subr.mxu0 0.0
    %446 = vmatpush1.msra.mxu0 %v399
    %447 = vmatprep.subr.mxu0 0.0
    %448 = vmatpush2.msra.mxu0 0.0
    %449 = vmatprep.subr.mxu0 0.0
    %450 = vmatpush2.msra.mxu0 0.0
    %451 = vmatprep.subr.mxu0 0.0
    %452 = vmatpush2.msra.mxu0 0.0
    %453 = vmatprep.subr.mxu0 0.0
    %454 = vmatpush2.msra.mxu0 0.0
    %455 = vmatprep.subr.mxu0 0.0
    %456 = vmatpush2.msra.mxu0 0.0
    %457 = vmatprep.subr.mxu0 0.0
    %458 = vmatpush2.msra.mxu0 0.0
    %459 = vmatprep.subr.mxu0 0.0
    %460 = vmatpush2.msra.mxu0 0.0
    %461 = vmatprep.subr.mxu0 0.0
    %462 = vmatpush2.msra.mxu0 0.0
    %463 = vmatprep.subr.mxu0 0.0
    %464 = vmatpush2.msra.mxu0 0.0
    %465 = vmatprep.subr.mxu0 0.0
    %466 = vmatpush2.msra.mxu0 0.0
    %467 = vmatprep.subr.mxu0 0.0
    %468 = vmatpush2.msra.mxu0 0.0
    %469 = vmatprep.subr.mxu0 0.0
    %470 = vmatpush2.msra.mxu0 0.0
    %471 = vmatprep.subr.mxu0 0.0
    %472 = vmatpush2.msra.mxu0 0.0
    %473 = vmatprep.subr.mxu0 0.0
    %474 = vmatpush2.msra.mxu0 0.0
    %475 = vmatprep.subr.mxu0 0.0
    %476 = vmatpush2.msra.mxu0 0.0
    %477 = vmatprep.subr.mxu0 0.0
    %478 = vmatpush2.msra.mxu0 0.0
    %479 = vmatprep.mubr.f32.mxu0 0.0
    %480 = vmatmul.mubr.f32.gmra.mxu0 %v404
    %v481 = vpop.f32.mrf.mxu0
    %v482 = vadd.f32 0.0, %v481
    %v483 = vpop.f32.mrf.mxu0
    %484 = vmatprep.mubr.f32.mxu0 0.0
    %485 = vmatmul.mubr.f32.gmra.mxu0 %v407
    %v486 = vpop.f32.mrf.mxu0
    %v487 = vadd.f32 0.0, %v486
    %v488 = vpop.f32.mrf.mxu0
    %489 = vmatprep.mubr.f32.mxu0 0.0
    %490 = vmatmul.mubr.f32.gmra.mxu0 %v410
    %v491 = vpop.f32.mrf.mxu0
    %v492 = vadd.f32 0.0, %v491
    %v493 = vpop.f32.mrf.mxu0
    %494 = vmatprep.mubr.f32.mxu0 0.0
    %495 = vmatmul.mubr.f32.gmra.mxu0 %v413
    %v496 = vpop.f32.mrf.mxu0
    %v497 = vadd.f32 0.0, %v496
    %v498 = vpop.f32.mrf.mxu0
    %499 = vdwg.mxu0
    %v500 = vmul.f32 %v267, %v482
    %v501 = vmul.f32 %v272, %v487
    %v502 = vmul.f32 %v277, %v492
    %v503 = vmul.f32 %v282, %v497
    %v504 = vld [vmem:[%s10] sm:$0xff]
    %v505 = vld [vmem:[%s10 + $0x8] sm:$0xff]
    %v506 = vld [vmem:[%s10 + $0x10] sm:$0xff]
    %v507 = vld [vmem:[%s10 + $0x18] sm:$0xff]
    %v509 = vsel %vm187, %v500, 0
    %v512 = vsel %vm187, %v501, 0
    %v515 = vsel %vm187, %v502, 0
    %v518 = vsel %vm187, %v503, 0
    %520 = vmatprep.subr.mxu0 0.0
    %521 = vmatpush1.msra.mxu0 0.0
    %522 = vmatprep.subr.mxu0 0.0
    %523 = vmatpush1.msra.mxu0 0.0
    %524 = vmatprep.subr.mxu0 0.0
    %525 = vmatpush1.msra.mxu0 0.0
    %526 = vmatprep.subr.mxu0 0.0
    %527 = vmatpush1.msra.mxu0 0.0
    %528 = vmatprep.subr.mxu0 0.0
    %529 = vmatpush1.msra.mxu0 0.0
    %530 = vmatprep.subr.mxu0 0.0
    %531 = vmatpush1.msra.mxu0 0.0
    %532 = vmatprep.subr.mxu0 0.0
    %533 = vmatpush1.msra.mxu0 0.0
    %534 = vmatprep.subr.mxu0 0.0
    %535 = vmatpush1.msra.mxu0 0.0
    %536 = vmatprep.subr.mxu0 0.0
    %537 = vmatpush1.msra.mxu0 0.0
    %538 = vmatprep.subr.mxu0 0.0
    %539 = vmatpush1.msra.mxu0 0.0
    %540 = vmatprep.subr.mxu0 0.0
    %541 = vmatpush1.msra.mxu0 0.0
    %542 = vmatprep.subr.mxu0 0.0
    %543 = vmatpush1.msra.mxu0 0.0
    %544 = vmatprep.subr.mxu0 0.0
    %545 = vmatpush1.msra.mxu0 %v507
    %546 = vmatprep.subr.mxu0 0.0
    %547 = vmatpush1.msra.mxu0 %v506
    %548 = vmatprep.subr.mxu0 0.0
    %549 = vmatpush1.msra.mxu0 %v505
    %550 = vmatprep.subr.mxu0 0.0
    %551 = vmatpush1.msra.mxu0 %v504
    %552 = vmatprep.subr.mxu0 0.0
    %553 = vmatpush2.msra.mxu0 0.0
    %554 = vmatprep.subr.mxu0 0.0
    %555 = vmatpush2.msra.mxu0 0.0
    %556 = vmatprep.subr.mxu0 0.0
    %557 = vmatpush2.msra.mxu0 0.0
    %558 = vmatprep.subr.mxu0 0.0
    %559 = vmatpush2.msra.mxu0 0.0
    %560 = vmatprep.subr.mxu0 0.0
    %561 = vmatpush2.msra.mxu0 0.0
    %562 = vmatprep.subr.mxu0 0.0
    %563 = vmatpush2.msra.mxu0 0.0
    %564 = vmatprep.subr.mxu0 0.0
    %565 = vmatpush2.msra.mxu0 0.0
    %566 = vmatprep.subr.mxu0 0.0
    %567 = vmatpush2.msra.mxu0 0.0
    %568 = vmatprep.subr.mxu0 0.0
    %569 = vmatpush2.msra.mxu0 0.0
    %570 = vmatprep.subr.mxu0 0.0
    %571 = vmatpush2.msra.mxu0 0.0
    %572 = vmatprep.subr.mxu0 0.0
    %573 = vmatpush2.msra.mxu0 0.0
    %574 = vmatprep.subr.mxu0 0.0
    %575 = vmatpush2.msra.mxu0 0.0
    %576 = vmatprep.subr.mxu0 0.0
    %577 = vmatpush2.msra.mxu0 0.0
    %578 = vmatprep.subr.mxu0 0.0
    %579 = vmatpush2.msra.mxu0 0.0
    %580 = vmatprep.subr.mxu0 0.0
    %581 = vmatpush2.msra.mxu0 0.0
    %582 = vmatprep.subr.mxu0 0.0
    %583 = vmatpush2.msra.mxu0 0.0
    %584 = vmatprep.mubr.f32.mxu0 0.0
    %585 = vmatmul.mubr.f32.gmra.mxu0 %v509
    %v586 = vpop.f32.mrf.mxu0
    %v587 = vadd.f32 0.0, %v586
    %v588 = vpop.f32.mrf.mxu0
    %589 = vmatprep.mubr.f32.mxu0 0.0
    %590 = vmatmul.mubr.f32.gmra.mxu0 %v512
    %v591 = vpop.f32.mrf.mxu0
    %v592 = vadd.f32 0.0, %v591
    %v593 = vpop.f32.mrf.mxu0
    %594 = vmatprep.mubr.f32.mxu0 0.0
    %595 = vmatmul.mubr.f32.gmra.mxu0 %v515
    %v596 = vpop.f32.mrf.mxu0
    %v597 = vadd.f32 0.0, %v596
    %v598 = vpop.f32.mrf.mxu0
    %599 = vmatprep.mubr.f32.mxu0 0.0
    %600 = vmatmul.mubr.f32.gmra.mxu0 %v518
    %v601 = vpop.f32.mrf.mxu0
    %v602 = vadd.f32 0.0, %v601
    %v603 = vpop.f32.mrf.mxu0
    %604 = vdwg.mxu0
    %v605 = vmul.f32 %v587, 0.17677669
    %v606 = vmul.f32 %v592, 0.17677669
    %v607 = vmul.f32 %v597, 0.17677669
    %v608 = vmul.f32 %v602, 0.17677669
    %vm609 = vcmask 64512
    %v610 = vsel %vm609, %v605, -inf
    %v611 = vsel %vm609, %v606, -inf
    %v612 = vsel %vm609, %v607, -inf
    %v613 = vsel %vm609, %v608, -inf
    %v614 = vmax.f32 %v610, %v611
    %v615 = vmax.f32 %v612, %v613
    %v616 = vmax.f32 %v614, %v615
    %617 = vmax.xlane.f32.xlu0 %v616
    %v618 = vpop.xlane.xlu0 %617
    %v619 = vrot.slane %v618, 4
    %v620 = vmax.f32 %v618, %v619
    %v621 = vrot.slane %v620, 2
    %v622 = vmax.f32 %v620, %v621
    %v623 = vrot.slane %v622, 1
    %v624 = vmax.f32 %v622, %v623
    %s625 = vtos %v624
    %v626 = vstv %s625
    %v627 = vsub.f32 %v605, %v626
    %v628 = vsub.f32 %v606, %v626
    %v629 = vsub.f32 %v607, %v626
    %v630 = vsub.f32 %v608, %v626
    %v631 = vmul.f32 %v627, 1.442695
    %v632 = vpow.pop %v631
    %v633 = vmul.f32 %v628, 1.442695
    %v634 = vpow.pop %v633
    %v635 = vmul.f32 %v629, 1.442695
    %v636 = vpow.pop %v635
    %v637 = vmul.f32 %v630, 1.442695
    %v638 = vpow.pop %v637
    %v639 = vld [vmem:[%s12] sm:$0xff]
    %v640 = vld [vmem:[%s12 + $0x8] sm:$0xff]
    %v641 = vld [vmem:[%s12 + $0x10] sm:$0xff]
    %v642 = vld [vmem:[%s12 + $0x18] sm:$0xff]
    %v644 = vsel %vm187, %v639, 0
    %v647 = vsel %vm187, %v640, 0
    %v650 = vsel %vm187, %v641, 0
    %v653 = vsel %vm187, %v642, 0
    %655 = vmatprep.subr.mxu0 0.0
    %656 = vmatpush1.msra.mxu0 0.0
    %657 = vmatprep.subr.mxu0 0.0
    %658 = vmatpush1.msra.mxu0 0.0
    %659 = vmatprep.subr.mxu0 0.0
    %660 = vmatpush1.msra.mxu0 0.0
    %661 = vmatprep.subr.mxu0 0.0
    %662 = vmatpush1.msra.mxu0 0.0
    %663 = vmatprep.subr.mxu0 0.0
    %664 = vmatpush1.msra.mxu0 0.0
    %665 = vmatprep.subr.mxu0 0.0
    %666 = vmatpush1.msra.mxu0 0.0
    %667 = vmatprep.subr.mxu0 0.0
    %668 = vmatpush1.msra.mxu0 0.0
    %669 = vmatprep.subr.mxu0 0.0
    %670 = vmatpush1.msra.mxu0 0.0
    %671 = vmatprep.subr.mxu0 0.0
    %672 = vmatpush1.msra.mxu0 0.0
    %673 = vmatprep.subr.mxu0 0.0
    %674 = vmatpush1.msra.mxu0 0.0
    %675 = vmatprep.subr.mxu0 0.0
    %676 = vmatpush1.msra.mxu0 0.0
    %677 = vmatprep.subr.mxu0 0.0
    %678 = vmatpush1.msra.mxu0 0.0
    %679 = vmatprep.subr.mxu0 0.0
    %680 = vmatpush1.msra.mxu0 %v638
    %681 = vmatprep.subr.mxu0 0.0
    %682 = vmatpush1.msra.mxu0 %v636
    %683 = vmatprep.subr.mxu0 0.0
    %684 = vmatpush1.msra.mxu0 %v634
    %685 = vmatprep.subr.mxu0 0.0
    %686 = vmatpush1.msra.mxu0 %v632
    %687 = vmatprep.subr.mxu0 0.0
    %688 = vmatpush2.msra.mxu0 0.0
    %689 = vmatprep.subr.mxu0 0.0
    %690 = vmatpush2.msra.mxu0 0.0
    %691 = vmatprep.subr.mxu0 0.0
    %692 = vmatpush2.msra.mxu0 0.0
    %693 = vmatprep.subr.mxu0 0.0
    %694 = vmatpush2.msra.mxu0 0.0
    %695 = vmatprep.subr.mxu0 0.0
    %696 = vmatpush2.msra.mxu0 0.0
    %697 = vmatprep.subr.mxu0 0.0
    %698 = vmatpush2.msra.mxu0 0.0
    %699 = vmatprep.subr.mxu0 0.0
    %700 = vmatpush2.msra.mxu0 0.0
    %701 = vmatprep.subr.mxu0 0.0
    %702 = vmatpush2.msra.mxu0 0.0
    %703 = vmatprep.subr.mxu0 0.0
    %704 = vmatpush2.msra.mxu0 0.0
    %705 = vmatprep.subr.mxu0 0.0
    %706 = vmatpush2.msra.mxu0 0.0
    %707 = vmatprep.subr.mxu0 0.0
    %708 = vmatpush2.msra.mxu0 0.0
    %709 = vmatprep.subr.mxu0 0.0
    %710 = vmatpush2.msra.mxu0 0.0
    %711 = vmatprep.subr.mxu0 0.0
    %712 = vmatpush2.msra.mxu0 0.0
    %713 = vmatprep.subr.mxu0 0.0
    %714 = vmatpush2.msra.mxu0 0.0
    %715 = vmatprep.subr.mxu0 0.0
    %716 = vmatpush2.msra.mxu0 0.0
    %717 = vmatprep.subr.mxu0 0.0
    %718 = vmatpush2.msra.mxu0 0.0
    %719 = vmatprep.mubr.f32.mxu0 0.0
    %720 = vmatmul.mubr.f32.gmra.mxu0 %v644
    %v721 = vpop.f32.mrf.mxu0
    %v722 = vadd.f32 0.0, %v721
    %v723 = vpop.f32.mrf.mxu0
    %724 = vmatprep.mubr.f32.mxu0 0.0
    %725 = vmatmul.mubr.f32.gmra.mxu0 %v647
    %v726 = vpop.f32.mrf.mxu0
    %v727 = vadd.f32 0.0, %v726
    %v728 = vpop.f32.mrf.mxu0
    %729 = vmatprep.mubr.f32.mxu0 0.0
    %730 = vmatmul.mubr.f32.gmra.mxu0 %v650
    %v731 = vpop.f32.mrf.mxu0
    %v732 = vadd.f32 0.0, %v731
    %v733 = vpop.f32.mrf.mxu0
    %734 = vmatprep.mubr.f32.mxu0 0.0
    %735 = vmatmul.mubr.f32.gmra.mxu0 %v653
    %v736 = vpop.f32.mrf.mxu0
    %v737 = vadd.f32 0.0, %v736
    %v738 = vpop.f32.mrf.mxu0
    %739 = vdwg.mxu0
    %v740 = vsel %vm609, %v722, 0.0
    %741 = vadd.xlane.f32.xlu0 %v740
    %v742 = vpop.xlane.xlu0 %741
    %v743 = vsel %vm609, %v727, 0.0
    %744 = vadd.xlane.f32.xlu0 %v743
    %v745 = vpop.xlane.xlu0 %744
    %v746 = vsel %vm609, %v732, 0.0
    %747 = vadd.xlane.f32.xlu0 %v746
    %v748 = vpop.xlane.xlu0 %747
    %v749 = vsel %vm609, %v737, 0.0
    %750 = vadd.xlane.f32.xlu0 %v749
    %v751 = vpop.xlane.xlu0 %750
    %v752 = vrcp.pop %v742
    %v753 = vmul.f32 %v632, %v752
    %v754 = vrcp.pop %v745
    %v755 = vmul.f32 %v634, %v754
    %v756 = vrcp.pop %v748
    %v757 = vmul.f32 %v636, %v756
    %v758 = vrcp.pop %v751
    %v759 = vmul.f32 %v638, %v758
    %760 = vst.msk [vmem:[%s14] sm:$0xff] %vm609, %v753
    %761 = vst.msk [vmem:[%s14 + $0x8] sm:$0xff] %vm609, %v755
    %762 = vst.msk [vmem:[%s14 + $0x10] sm:$0xff] %vm609, %v757
    %763 = vst.msk [vmem:[%s14 + $0x18] sm:$0xff] %vm609, %v759
    %v764 = vld [vmem:[%s11] sm:$0xff]
    %v766 = vsel %vm609, %v753, 0
    %v769 = vsel %vm609, %v755, 0
    %v772 = vsel %vm609, %v757, 0
    %v775 = vsel %vm609, %v759, 0
    %777 = vmatprep.subr.mxu0 0.0
    %778 = vmatpush1.msra.mxu0 0.0
    %779 = vmatprep.subr.mxu0 0.0
    %780 = vmatpush1.msra.mxu0 0.0
    %781 = vmatprep.subr.mxu0 0.0
    %782 = vmatpush1.msra.mxu0 0.0
    %783 = vmatprep.subr.mxu0 0.0
    %784 = vmatpush1.msra.mxu0 0.0
    %785 = vmatprep.subr.mxu0 0.0
    %786 = vmatpush1.msra.mxu0 0.0
    %787 = vmatprep.subr.mxu0 0.0
    %788 = vmatpush1.msra.mxu0 0.0
    %789 = vmatprep.subr.mxu0 0.0
    %790 = vmatpush1.msra.mxu0 0.0
    %791 = vmatprep.subr.mxu0 0.0
    %792 = vmatpush1.msra.mxu0 0.0
    %793 = vmatprep.subr.mxu0 0.0
    %794 = vmatpush1.msra.mxu0 0.0
    %795 = vmatprep.subr.mxu0 0.0
    %796 = vmatpush1.msra.mxu0 0.0
    %797 = vmatprep.subr.mxu0 0.0
    %798 = vmatpush1.msra.mxu0 0.0
    %799 = vmatprep.subr.mxu0 0.0
    %800 = vmatpush1.msra.mxu0 0.0
    %801 = vmatprep.subr.mxu0 0.0
    %802 = vmatpush1.msra.mxu0 0.0
    %803 = vmatprep.subr.mxu0 0.0
    %804 = vmatpush1.msra.mxu0 0.0
    %805 = vmatprep.subr.mxu0 0.0
    %806 = vmatpush1.msra.mxu0 0.0
    %807 = vmatprep.subr.mxu0 0.0
    %808 = vmatpush1.msra.mxu0 %v764
    %809 = vmatprep.subr.mxu0 0.0
    %810 = vmatpush2.msra.mxu0 0.0
    %811 = vmatprep.subr.mxu0 0.0
    %812 = vmatpush2.msra.mxu0 0.0
    %813 = vmatprep.subr.mxu0 0.0
    %814 = vmatpush2.msra.mxu0 0.0
    %815 = vmatprep.subr.mxu0 0.0
    %816 = vmatpush2.msra.mxu0 0.0
    %817 = vmatprep.subr.mxu0 0.0
    %818 = vmatpush2.msra.mxu0 0.0
    %819 = vmatprep.subr.mxu0 0.0
    %820 = vmatpush2.msra.mxu0 0.0
    %821 = vmatprep.subr.mxu0 0.0
    %822 = vmatpush2.msra.mxu0 0.0
    %823 = vmatprep.subr.mxu0 0.0
    %824 = vmatpush2.msra.mxu0 0.0
    %825 = vmatprep.subr.mxu0 0.0
    %826 = vmatpush2.msra.mxu0 0.0
    %827 = vmatprep.subr.mxu0 0.0
    %828 = vmatpush2.msra.mxu0 0.0
    %829 = vmatprep.subr.mxu0 0.0
    %830 = vmatpush2.msra.mxu0 0.0
    %831 = vmatprep.subr.mxu0 0.0
    %832 = vmatpush2.msra.mxu0 0.0
    %833 = vmatprep.subr.mxu0 0.0
    %834 = vmatpush2.msra.mxu0 0.0
    %835 = vmatprep.subr.mxu0 0.0
    %836 = vmatpush2.msra.mxu0 0.0
    %837 = vmatprep.subr.mxu0 0.0
    %838 = vmatpush2.msra.mxu0 0.0
    %839 = vmatprep.subr.mxu0 0.0
    %840 = vmatpush2.msra.mxu0 0.0
    %841 = vmatprep.mubr.f32.mxu0 0.0
    %842 = vmatmul.mubr.f32.gmra.mxu0 %v766
    %v843 = vpop.f32.mrf.mxu0
    %v844 = vadd.f32 0.0, %v843
    %v845 = vpop.f32.mrf.mxu0
    %846 = vmatprep.mubr.f32.mxu0 0.0
    %847 = vmatmul.mubr.f32.gmra.mxu0 %v769
    %v848 = vpop.f32.mrf.mxu0
    %v849 = vadd.f32 0.0, %v848
    %v850 = vpop.f32.mrf.mxu0
    %851 = vmatprep.mubr.f32.mxu0 0.0
    %852 = vmatmul.mubr.f32.gmra.mxu0 %v772
    %v853 = vpop.f32.mrf.mxu0
    %v854 = vadd.f32 0.0, %v853
    %v855 = vpop.f32.mrf.mxu0
    %856 = vmatprep.mubr.f32.mxu0 0.0
    %857 = vmatmul.mubr.f32.gmra.mxu0 %v775
    %v858 = vpop.f32.mrf.mxu0
    %v859 = vadd.f32 0.0, %v858
    %v860 = vpop.f32.mrf.mxu0
    %861 = vdwg.mxu0
    %866 = vrot.lane.b32.xlu0 %v267, 96
    %v867 = vpop.permute.xlu0 %866
    %868 = vrot.lane.b32.xlu0 %v272, 96
    %v869 = vpop.permute.xlu0 %868
    %870 = vrot.lane.b32.xlu0 %v277, 96
    %v871 = vpop.permute.xlu0 %870
    %872 = vrot.lane.b32.xlu0 %v282, 96
    %v873 = vpop.permute.xlu0 %872
    %v878 = vmul.f32 %v844, %v867
    %v879 = vmul.f32 %v849, %v869
    %v880 = vmul.f32 %v854, %v871
    %v881 = vmul.f32 %v859, %v873
    %v882 = vld [vmem:[%s9] sm:$0xff]
    %v883 = vld [vmem:[%s9 + $0x8] sm:$0xff]
    %v884 = vld [vmem:[%s9 + $0x10] sm:$0xff]
    %v885 = vld [vmem:[%s9 + $0x18] sm:$0xff]
    %v887 = vsel %vm187, %v878, 0
    %v890 = vsel %vm187, %v879, 0
    %v893 = vsel %vm187, %v880, 0
    %v896 = vsel %vm187, %v881, 0
    %898 = vmatprep.subr.mxu0 0.0
    %899 = vmatpush1.msra.mxu0 0.0
    %900 = vmatprep.subr.mxu0 0.0
    %901 = vmatpush1.msra.mxu0 0.0
    %902 = vmatprep.subr.mxu0 0.0
    %903 = vmatpush1.msra.mxu0 0.0
    %904 = vmatprep.subr.mxu0 0.0
    %905 = vmatpush1.msra.mxu0 0.0
    %906 = vmatprep.subr.mxu0 0.0
    %907 = vmatpush1.msra.mxu0 0.0
    %908 = vmatprep.subr.mxu0 0.0
    %909 = vmatpush1.msra.mxu0 0.0
    %910 = vmatprep.subr.mxu0 0.0
    %911 = vmatpush1.msra.mxu0 0.0
    %912 = vmatprep.subr.mxu0 0.0
    %913 = vmatpush1.msra.mxu0 0.0
    %914 = vmatprep.subr.mxu0 0.0
    %915 = vmatpush1.msra.mxu0 0.0
    %916 = vmatprep.subr.mxu0 0.0
    %917 = vmatpush1.msra.mxu0 0.0
    %918 = vmatprep.subr.mxu0 0.0
    %919 = vmatpush1.msra.mxu0 0.0
    %920 = vmatprep.subr.mxu0 0.0
    %921 = vmatpush1.msra.mxu0 0.0
    %922 = vmatprep.subr.mxu0 0.0
    %923 = vmatpush1.msra.mxu0 %v885
    %924 = vmatprep.subr.mxu0 0.0
    %925 = vmatpush1.msra.mxu0 %v884
    %926 = vmatprep.subr.mxu0 0.0
    %927 = vmatpush1.msra.mxu0 %v883
    %928 = vmatprep.subr.mxu0 0.0
    %929 = vmatpush1.msra.mxu0 %v882
    %930 = vmatprep.subr.mxu0 0.0
    %931 = vmatpush2.msra.mxu0 0.0
    %932 = vmatprep.subr.mxu0 0.0
    %933 = vmatpush2.msra.mxu0 0.0
    %934 = vmatprep.subr.mxu0 0.0
    %935 = vmatpush2.msra.mxu0 0.0
    %936 = vmatprep.subr.mxu0 0.0
    %937 = vmatpush2.msra.mxu0 0.0
    %938 = vmatprep.subr.mxu0 0.0
    %939 = vmatpush2.msra.mxu0 0.0
    %940 = vmatprep.subr.mxu0 0.0
    %941 = vmatpush2.msra.mxu0 0.0
    %942 = vmatprep.subr.mxu0 0.0
    %943 = vmatpush2.msra.mxu0 0.0
    %944 = vmatprep.subr.mxu0 0.0
    %945 = vmatpush2.msra.mxu0 0.0
    %946 = vmatprep.subr.mxu0 0.0
    %947 = vmatpush2.msra.mxu0 0.0
    %948 = vmatprep.subr.mxu0 0.0
    %949 = vmatpush2.msra.mxu0 0.0
    %950 = vmatprep.subr.mxu0 0.0
    %951 = vmatpush2.msra.mxu0 0.0
    %952 = vmatprep.subr.mxu0 0.0
    %953 = vmatpush2.msra.mxu0 0.0
    %954 = vmatprep.subr.mxu0 0.0
    %955 = vmatpush2.msra.mxu0 0.0
    %956 = vmatprep.subr.mxu0 0.0
    %957 = vmatpush2.msra.mxu0 0.0
    %958 = vmatprep.subr.mxu0 0.0
    %959 = vmatpush2.msra.mxu0 0.0
    %960 = vmatprep.subr.mxu0 0.0
    %961 = vmatpush2.msra.mxu0 0.0
    %962 = vmatprep.mubr.f32.mxu0 0.0
    %963 = vmatmul.mubr.f32.gmra.mxu0 %v887
    %v964 = vpop.f32.mrf.mxu0
    %v965 = vadd.f32 0.0, %v964
    %v966 = vpop.f32.mrf.mxu0
    %967 = vmatprep.mubr.f32.mxu0 0.0
    %968 = vmatmul.mubr.f32.gmra.mxu0 %v890
    %v969 = vpop.f32.mrf.mxu0
    %v970 = vadd.f32 0.0, %v969
    %v971 = vpop.f32.mrf.mxu0
    %972 = vmatprep.mubr.f32.mxu0 0.0
    %973 = vmatmul.mubr.f32.gmra.mxu0 %v893
    %v974 = vpop.f32.mrf.mxu0
    %v975 = vadd.f32 0.0, %v974
    %v976 = vpop.f32.mrf.mxu0
    %977 = vmatprep.mubr.f32.mxu0 0.0
    %978 = vmatmul.mubr.f32.gmra.mxu0 %v896
    %v979 = vpop.f32.mrf.mxu0
    %v980 = vadd.f32 0.0, %v979
    %v981 = vpop.f32.mrf.mxu0
    %982 = vdwg.mxu0
    %v983 = vld [vmem:[%s7] sm:$0x3]
    %v984 = vld [vmem:[%s8] sm:$0xff]
    %v985 = vld [vmem:[%s8 + $0x8] sm:$0xff]
    %v986 = vld [vmem:[%s8 + $0x10] sm:$0xff]
    %v987 = vld [vmem:[%s8 + $0x18] sm:$0xff]
    %v988 = vmul.f32 %v965, %v984
    %v989 = vmul.f32 %v970, %v985
    %v990 = vmul.f32 %v975, %v986
    %v991 = vmul.f32 %v980, %v987
    %v993 = vsel %vm187, %v983, 0
    %995 = vmatprep.subr.mxu0 0.0
    %996 = vmatpush1.msra.mxu0 0.0
    %997 = vmatprep.subr.mxu0 0.0
    %998 = vmatpush1.msra.mxu0 0.0
    %999 = vmatprep.subr.mxu0 0.0
    %1000 = vmatpush1.msra.mxu0 0.0
    %1001 = vmatprep.subr.mxu0 0.0
    %1002 = vmatpush1.msra.mxu0 0.0
    %1003 = vmatprep.subr.mxu0 0.0
    %1004 = vmatpush1.msra.mxu0 0.0
    %1005 = vmatprep.subr.mxu0 0.0
    %1006 = vmatpush1.msra.mxu0 0.0
    %1007 = vmatprep.subr.mxu0 0.0
    %1008 = vmatpush1.msra.mxu0 0.0
    %1009 = vmatprep.subr.mxu0 0.0
    %1010 = vmatpush1.msra.mxu0 0.0
    %1011 = vmatprep.subr.mxu0 0.0
    %1012 = vmatpush1.msra.mxu0 0.0
    %1013 = vmatprep.subr.mxu0 0.0
    %1014 = vmatpush1.msra.mxu0 0.0
    %1015 = vmatprep.subr.mxu0 0.0
    %1016 = vmatpush1.msra.mxu0 0.0
    %1017 = vmatprep.subr.mxu0 0.0
    %1018 = vmatpush1.msra.mxu0 0.0
    %1019 = vmatprep.subr.mxu0 0.0
    %1020 = vmatpush1.msra.mxu0 %v991
    %1021 = vmatprep.subr.mxu0 0.0
    %1022 = vmatpush1.msra.mxu0 %v990
    %1023 = vmatprep.subr.mxu0 0.0
    %1024 = vmatpush1.msra.mxu0 %v989
    %1025 = vmatprep.subr.mxu0 0.0
    %1026 = vmatpush1.msra.mxu0 %v988
    %1027 = vmatprep.subr.mxu0 0.0
    %1028 = vmatpush2.msra.mxu0 0.0
    %1029 = vmatprep.subr.mxu0 0.0
    %1030 = vmatpush2.msra.mxu0 0.0
    %1031 = vmatprep.subr.mxu0 0.0
    %1032 = vmatpush2.msra.mxu0 0.0
    %1033 = vmatprep.subr.mxu0 0.0
    %1034 = vmatpush2.msra.mxu0 0.0
    %1035 = vmatprep.subr.mxu0 0.0
    %1036 = vmatpush2.msra.mxu0 0.0
    %1037 = vmatprep.subr.mxu0 0.0
    %1038 = vmatpush2.msra.mxu0 0.0
    %1039 = vmatprep.subr.mxu0 0.0
    %1040 = vmatpush2.msra.mxu0 0.0
    %1041 = vmatprep.subr.mxu0 0.0
    %1042 = vmatpush2.msra.mxu0 0.0
    %1043 = vmatprep.subr.mxu0 0.0
    %1044 = vmatpush2.msra.mxu0 0.0
    %1045 = vmatprep.subr.mxu0 0.0
    %1046 = vmatpush2.msra.mxu0 0.0
    %1047 = vmatprep.subr.mxu0 0.0
    %1048 = vmatpush2.msra.mxu0 0.0
    %1049 = vmatprep.subr.mxu0 0.0
    %1050 = vmatpush2.msra.mxu0 0.0
    %1051 = vmatprep.subr.mxu0 0.0
    %1052 = vmatpush2.msra.mxu0 0.0
    %1053 = vmatprep.subr.mxu0 0.0
    %1054 = vmatpush2.msra.mxu0 0.0
    %1055 = vmatprep.subr.mxu0 0.0
    %1056 = vmatpush2.msra.mxu0 0.0
    %1057 = vmatprep.subr.mxu0 0.0
    %1058 = vmatpush2.msra.mxu0 0.0
    %1059 = vmatprep.mubr.f32.mxu0 0.0
    %1060 = vmatmul.mubr.f32.gmra.mxu0 %v993
    %v1061 = vpop.f32.mrf.mxu0
    %v1062 = vadd.f32 0.0, %v1061
    %v1063 = vpop.f32.mrf.mxu0
    %1064 = vdwg.mxu0
    %vm1065 = vcmask 254976
    %1066 = vst.msk [vmem:[#allocation8] sm:$0x3] %vm1065, %v1062
    // Predicated region
    $region66: #{tpu_custom_call.1} parent=1 // pred_check
      _
    $region67: #{tpu_custom_call.1} parent=1 // pred_check_branch
      %1068 = sbr.rel (0) target = $region69
    $region68: #{tpu_custom_call.1} parent=1 // pred_region
      %s1070 = ssub.s32 32, 32
      %1071 = vsyncadd [#allocation4], %s1070
      %s1073 = sshll.u32 [#allocation8], 4
      %s1074 = int_to_ptr.vmem [resolvable:$true] %s1073
      %1076 = dma.vmem_to_hbm [thread:$0]  %s1074, 32, %s13, [#allocation4]
    $region69: #{tpu_custom_call.1} parent=1 // pred_fallthru
      _
    // Predicated region
    $region70: #{tpu_custom_call.1} parent=1 // pred_check
      _
    $region71: #{tpu_custom_call.1} parent=1 // pred_check_branch
      %1078 = sbr.rel (0) target = $region73
    $region72: #{tpu_custom_call.1} parent=1 // pred_region
      _
    $region73: #{tpu_custom_call.1} parent=1 // pred_fallthru
      _
    // Predicated region
    $region74: #{tpu_custom_call.1} parent=1 // pred_check
      _
    $region75: #{tpu_custom_call.1} parent=1 // pred_check_branch
      %1080 = sbr.rel (0) target = $region77
    $region76: #{tpu_custom_call.1} parent=1 // pred_region
      %1081 = dma.done [#allocation4], 32
    $region77: #{tpu_custom_call.1} parent=1 // pred_fallthru
      _
    // Predicated region
    $region78: #{tpu_custom_call.1} parent=1 // pred_check
      _
    $region79: #{tpu_custom_call.1} parent=1 // pred_check_branch
      %1083 = sbr.rel (0) target = $region81
    $region80: #{tpu_custom_call.1} parent=1 // pred_region
      _
    $region81: #{tpu_custom_call.1} parent=1 // pred_fallthru
      _
    %1084 = vsyncpa [#allocation3], 1
    %1085 = vsyncpa [#allocation6], 1
    %1086 = vsyncpa [#allocation4], 1

</llo_original>
